<compile_context>
chip_gen: v5e
topology: v5e:2x2
jax: 0.10.0
libtpu: 0.0.40
codegen_flags: <defaults>
</compile_context>

<pallas_src>
import jax
import jax.numpy as jnp
from jax.experimental import pallas as pl
from jax.experimental.pallas import tpu as pltpu


# ----------------------------- helpers (glue) ------------------------------

def append_dims(x, target_ndim):
    return x.reshape(x.shape + (1,) * (target_ndim - x.ndim))


def edm_scaling(sigma, sigma_data=0.5):
    # DenoiserScaling instantiated from scaling_config -> EDMScaling(sigma_data=0.5)
    c_skip = sigma_data ** 2 / (sigma ** 2 + sigma_data ** 2)
    c_out = sigma * sigma_data / jnp.sqrt(sigma ** 2 + sigma_data ** 2)
    c_in = 1.0 / jnp.sqrt(sigma ** 2 + sigma_data ** 2)
    c_noise = 0.25 * jnp.log(sigma)
    return c_skip, c_out, c_in, c_noise


# ------------------------------ Pallas kernel -------------------------------

def _denoiser_kernel(cin_ref, cout_ref, cskip_ref,
                     x_ref, hd_ref, ri_ref, dri_ref,
                     wx_ref, whd_ref, b_ref, o_ref):
    # Blocks (channel-first, lane axis = HW):
    #   x_ref, ri_ref   : (TB, C,   HW)
    #   hd_ref, dri_ref : (TB, Chd, HW)
    #   wx_ref          : (Cout, C)      -- w[:C].T
    #   whd_ref         : (Cout, Chd)    -- w[C:].T
    #   b_ref           : (Cout, 1)
    #   o_ref           : (2, TB, Cout, HW)   axis0: 0 = latent half, 1 = lidar half
    i = pl.program_id(0)
    tb = x_ref.shape[0]

    wx = wx_ref[...].astype(jnp.float32)     # grid-invariant, loaded once per step
    whd = whd_ref[...].astype(jnp.float32)
    bias = b_ref[...].astype(jnp.float32)    # (Cout, 1) broadcasts over HW lanes

    for t in range(tb):                       # small static unroll (tb is 1..2)
        s = i * tb + t                        # absolute (un-doubled) batch index
        c_in = cin_ref[s]
        c_out = cout_ref[s]
        c_skip = cskip_ref[s]

        # ---- latent half: z = concat([x, hdmap], channel) ----
        x = x_ref[t].astype(jnp.float32)      # (C,   HW)
        hd = hd_ref[t].astype(jnp.float32)    # (Chd, HW)
        h = (jnp.dot(wx, x, preferred_element_type=jnp.float32)
             + jnp.dot(whd, hd, preferred_element_type=jnp.float32))   # (Cout, HW)
        o_ref[0, t, :, :] = ((h * c_in + bias) * c_out
                             + x * c_skip).astype(o_ref.dtype)

        # ---- lidar half: lidar_z = concat([range_image, dense_range_image]) ----
        r = ri_ref[t].astype(jnp.float32)     # (C,   HW)
        dr = dri_ref[t].astype(jnp.float32)   # (Chd, HW)
        h = (jnp.dot(wx, r, preferred_element_type=jnp.float32)
             + jnp.dot(whd, dr, preferred_element_type=jnp.float32))   # (Cout, HW)
        o_ref[1, t, :, :] = ((h * c_in + bias) * c_out
                             + r * c_skip).astype(o_ref.dtype)


def denoiser_apply(x, hdmap, range_image, dense_range, wxT, whdT, bias,
                   c_in, c_out, c_skip, *, batch_tile=None):
    """Fused doubled-batch denoiser hot path.

    x, range_image      : (B, C,   HW)
    hdmap, dense_range  : (B, Chd, HW)
    wxT                 : (Cout, C)
    whdT                : (Cout, Chd)
    bias                : (Cout, 1)
    c_in/c_out/c_skip   : (B,)  per-sample scalars (SMEM)
    Returns (2, B, Cout, HW): axis 0 = [latent half, lidar half].
    """
    B, C, HW = x.shape
    Chd = hdmap.shape[1]
    Cout = wxT.shape[0]
    # >= 2 grid steps whenever B >= 2 so both v7x TensorCores get work.
    tb = batch_tile if batch_tile is not None else (2 if B % 2 == 0 and B > 2 else 1)
    assert B % tb == 0

    return pl.pallas_call(
        _denoiser_kernel,
        out_shape=jax.ShapeDtypeStruct((2, B, Cout, HW), x.dtype),
        grid_spec=pltpu.PrefetchScalarGridSpec(
            num_scalar_prefetch=0,
            grid=(B // tb,),
            in_specs=[
                pl.BlockSpec(memory_space=pltpu.MemorySpace.SMEM),   # c_in   (B,)
                pl.BlockSpec(memory_space=pltpu.MemorySpace.SMEM),   # c_out  (B,)
                pl.BlockSpec(memory_space=pltpu.MemorySpace.SMEM),   # c_skip (B,)
                pl.BlockSpec((tb, C, HW), lambda i: (i, 0, 0)),      # x
                pl.BlockSpec((tb, Chd, HW), lambda i: (i, 0, 0)),    # hdmap
                pl.BlockSpec((tb, C, HW), lambda i: (i, 0, 0)),      # range_image
                pl.BlockSpec((tb, Chd, HW), lambda i: (i, 0, 0)),    # dense_range_image
                pl.BlockSpec((Cout, C), lambda i: (0, 0)),           # w_x^T   (grid-invariant)
                pl.BlockSpec((Cout, Chd), lambda i: (0, 0)),         # w_hd^T  (grid-invariant)
                pl.BlockSpec((Cout, 1), lambda i: (0, 0)),           # bias    (grid-invariant)
            ],
            out_specs=pl.BlockSpec((2, tb, Cout, HW), lambda i: (0, i, 0, 0)),
        ),
        compiler_params=pltpu.CompilerParams(
            dimension_semantics=("parallel",)),
    )(c_in, c_out, c_skip, x, hdmap, range_image, dense_range, wxT, whdT, bias)


# --------------------------- Denoiser.forward ------------------------------

def denoiser_forward(params, x, range_image, sigma, cond, cond_mask,
                     movie_len=2, sigma_data=0.5):
    B, C, H, W = x.shape

    # sigma = possibly_quantize_sigma(sigma)
    sigma_shape = sigma.shape
    sigma_b = append_dims(sigma, x.ndim)
    c_skip, c_out, c_in, c_noise = edm_scaling(sigma_b, sigma_data)
    c_noise = c_noise.reshape(sigma_shape)   # possibly_quantize_c_noise = identity

    # range_image is not None -> doubled-along-batch auxiliaries.  The c_* scaling
    # doubling is implicit in the kernel (both halves reuse the same per-sample
    # scalars), so only the tensors actually returned/fed to the network are doubled.
    c_noise = jnp.concatenate([c_noise, c_noise], axis=0)
    cond_mask2 = jnp.concatenate([cond_mask, cond_mask], axis=0)

    # 'hdmap' and 'dense_range_image' in cond, use_actionformer=False.
    # (The module's `boxes_emb.reshape(...)[:, 0]` is dead code: it is immediately
    #  overwritten by the concat below, so it is not reproduced here.)
    latent_hdmap = cond['hdmap']
    latent_boxes = cond['boxes_emb']
    latent_dense_range_image = cond['dense_range_image']
    boxes_emb = jnp.concatenate([latent_boxes, latent_boxes], axis=0)
    text_emb = jnp.concatenate([cond['text_emb'], cond['text_emb']], axis=0)
    actions = None

    # lidar_z is not None branch -> class labels for the doubled batch.
    classes = jnp.array([[1.0, 0.0], [0.0, 1.0]], dtype=x.dtype)
    classes_emb = jnp.concatenate([jnp.sin(classes), jnp.cos(classes)], axis=-1)
    class_label = jnp.concatenate(
        [jnp.tile(classes_emb[0][None, :], (B, 1)),
         jnp.tile(classes_emb[1][None, :], (B, 1))], axis=0)

    # TODO(synk): `network` (UNetModel) and `action_former` are external
    # nn.Modules passed into forward(); a deterministic 1x1-conv channel mixer
    # stands in for the network here (c_noise / class_label / boxes_emb /
    # text_emb / cond_mask are constructed but not consumed by the stand-in).
    w, bias = params['w'], params['b']          # (Cin, Cout), (1, Cout)
    Chd = latent_hdmap.shape[1]
    Cout = w.shape[1]
    assert Cout == C, "stand-in network must map back to real_input channels"
    wxT = jnp.transpose(w[:C])                  # (Cout, C)    - tiny, negligible
    whdT = jnp.transpose(w[C:])                 # (Cout, Chd)
    bias_c = bias.reshape(Cout, 1)

    HW = H * W
    out2 = denoiser_apply(
        x.reshape(B, C, HW),                                   # pure view, no transpose
        latent_hdmap.reshape(B, Chd, HW),
        range_image.reshape(B, C, HW),
        latent_dense_range_image.reshape(B, Chd, HW),
        wxT, whdT, bias_c,
        c_in.reshape(B), c_out.reshape(B), c_skip.reshape(B))

    # (2, B, Cout, HW) -> (2B, Cout, H, W): contiguous reshape, no data movement,
    # and matches torch.cat([z-half, lidar-half], dim=0) ordering.
    out = out2.reshape(2 * B, Cout, H, W)
    return out, dict(c_noise=c_noise, class_label=class_label,
                     cond_mask=cond_mask2, boxes_emb=boxes_emb,
                     text_emb=text_emb, actions=actions)


# ------------------------------ reference ----------------------------------

def denoiser_reference(params, x, range_image, sigma, cond, movie_len=2,
                       sigma_data=0.5):
    sigma_b = append_dims(sigma, x.ndim)
    c_skip, c_out, c_in, _ = edm_scaling(sigma_b, sigma_data)
    c_skip = jnp.concatenate([c_skip, c_skip], axis=0)
    c_out = jnp.concatenate([c_out, c_out], axis=0)
    c_in = jnp.concatenate([c_in, c_in], axis=0)
    z = jnp.concatenate([x, cond['hdmap']], axis=1)
    lidar_z = jnp.concatenate([range_image, cond['dense_range_image']], axis=1)
    inp = jnp.concatenate([z, lidar_z], axis=0)
    real = jnp.concatenate([x, range_image], axis=0)
    Cout = real.shape[1]
    h = jnp.einsum('bchw,co->bohw', inp * c_in, params['w'])
    h = h + params['b'].reshape(1, Cout, 1, 1)
    return h * c_out + real * c_skip


# --------------------------------- main -------------------------------------

if __name__ == "__main__":
    key = jax.random.PRNGKey(0)
    movie_len = 2
    b = 2
    B = b * movie_len             # x batch (4)
    C, Chd, H, W = 4, 4, 16, 16   # latent channels, hdmap channels, spatial
    Cin = C + Chd

    k = jax.random.split(key, 10)
    x = jax.random.normal(k[0], (B, C, H, W), jnp.float32)
    range_image = jax.random.normal(k[1], (B, C, H, W), jnp.float32)
    sigma = jnp.exp(jax.random.normal(k[2], (B,), jnp.float32))   # > 0
    cond = {
        'hdmap': jax.random.normal(k[3], (B, Chd, H, W), jnp.float32),
        'dense_range_image': jax.random.normal(k[4], (B, Chd, H, W), jnp.float32),
        'boxes_emb': jax.random.normal(k[5], (B, 6, 16), jnp.float32),
        'text_emb': jax.random.normal(k[6], (B, 8, 32), jnp.float32),
        'actions': jax.random.normal(k[7], (b, movie_len, 6), jnp.float32),
    }
    cond_mask = jnp.ones((B,), jnp.float32)

    # deterministic "network" parameters (1x1 conv: Cin -> C)
    params = {
        'w': jax.random.normal(k[8], (Cin, C), jnp.float32) * 0.1,
        'b': jax.random.normal(k[9], (1, C), jnp.float32) * 0.1,
    }

    out, aux = denoiser_forward(params, x, range_image, sigma, cond, cond_mask,
                                movie_len=movie_len)
    out = jax.block_until_ready(out)

    ref = denoiser_reference(params, x, range_image, sigma, cond,
                             movie_len=movie_len)
    assert out.shape == (2 * B, C, H, W), out.shape
    assert jnp.allclose(out, ref, atol=1e-4, rtol=1e-4), \
        float(jnp.max(jnp.abs(out - ref)))
    print("KERNEL_OK")
</pallas_src>

<mosaic_0001>
module attributes {stable_mosaic.version = 11 : i64} {
  func.func @_denoiser_kernel(%arg0: i32, %arg1: memref<4xf32, #tpu.memory_space<smem>>, %arg2: memref<4xf32, #tpu.memory_space<smem>>, %arg3: memref<4xf32, #tpu.memory_space<smem>>, %arg4: memref<2x4x256xf32, #tpu.memory_space<vmem>>, %arg5: memref<2x4x256xf32, #tpu.memory_space<vmem>>, %arg6: memref<2x4x256xf32, #tpu.memory_space<vmem>>, %arg7: memref<2x4x256xf32, #tpu.memory_space<vmem>>, %arg8: memref<4x4xf32, #tpu.memory_space<vmem>>, %arg9: memref<4x4xf32, #tpu.memory_space<vmem>>, %arg10: memref<4x1xf32, #tpu.memory_space<vmem>>, %arg11: memref<2x2x4x256xf32, #tpu.memory_space<vmem>>) attributes {dimension_semantics = [#tpu.dimension_semantics<parallel>], iteration_bounds = array<i64: 2>, scalar_prefetch = 0 : i64, scratch_operands = 0 : i64, tpu.core_type = #tpu.core_type<tc>, window_params = [{transform_indices = @transform_0, window_bounds = array<i64: 4>}, {transform_indices = @transform_1, window_bounds = array<i64: 4>}, {transform_indices = @transform_2, window_bounds = array<i64: 4>}, {transform_indices = @transform_3, window_bounds = array<i64: 2, 4, 256>}, {transform_indices = @transform_4, window_bounds = array<i64: 2, 4, 256>}, {transform_indices = @transform_5, window_bounds = array<i64: 2, 4, 256>}, {transform_indices = @transform_6, window_bounds = array<i64: 2, 4, 256>}, {pipeline_mode = #tpu.pipeline_mode<synchronous>, transform_indices = @transform_7, window_bounds = array<i64: 4, 4>}, {pipeline_mode = #tpu.pipeline_mode<synchronous>, transform_indices = @transform_8, window_bounds = array<i64: 4, 4>}, {pipeline_mode = #tpu.pipeline_mode<synchronous>, transform_indices = @transform_9, window_bounds = array<i64: 4, 1>}, {transform_indices = @transform_10, window_bounds = array<i64: 2, 2, 4, 256>}]} {
    %c0 = arith.constant 0 : index
    %c0_0 = arith.constant 0 : index
    %0 = vector.load %arg8[%c0, %c0_0] : memref<4x4xf32, #tpu.memory_space<vmem>>, vector<4x4xf32>
    %c0_1 = arith.constant 0 : index
    %c0_2 = arith.constant 0 : index
    %1 = vector.load %arg9[%c0_1, %c0_2] : memref<4x4xf32, #tpu.memory_space<vmem>>, vector<4x4xf32>
    %c0_3 = arith.constant 0 : index
    %c0_4 = arith.constant 0 : index
    %2 = vector.load %arg10[%c0_3, %c0_4] : memref<4x1xf32, #tpu.memory_space<vmem>>, vector<4x1xf32>
    %c2_i32 = arith.constant 2 : i32
    %3 = arith.muli %arg0, %c2_i32 : i32
    %c0_i32 = arith.constant 0 : i32
    %4 = arith.addi %3, %c0_i32 : i32
    %5 = arith.index_cast %4 : i32 to index
    %6 = memref.load %arg1[%5] : memref<4xf32, #tpu.memory_space<smem>>
    %7 = arith.index_cast %4 : i32 to index
    %8 = memref.load %arg2[%7] : memref<4xf32, #tpu.memory_space<smem>>
    %9 = arith.index_cast %4 : i32 to index
    %10 = memref.load %arg3[%9] : memref<4xf32, #tpu.memory_space<smem>>
    %c0_5 = arith.constant 0 : index
    %c0_6 = arith.constant 0 : index
    %c0_7 = arith.constant 0 : index
    %11 = vector.load %arg4[%c0_5, %c0_6, %c0_7] : memref<2x4x256xf32, #tpu.memory_space<vmem>>, vector<1x4x256xf32>
    %12 = vector.shape_cast %11 : vector<1x4x256xf32> to vector<4x256xf32>
    %c0_8 = arith.constant 0 : index
    %c0_9 = arith.constant 0 : index
    %c0_10 = arith.constant 0 : index
    %13 = vector.load %arg5[%c0_8, %c0_9, %c0_10] : memref<2x4x256xf32, #tpu.memory_space<vmem>>, vector<1x4x256xf32>
    %14 = vector.shape_cast %13 : vector<1x4x256xf32> to vector<4x256xf32>
    %cst = arith.constant dense<0.000000e+00> : vector<4x256xf32>
    %15 = tpu.matmul %0, %12, %cst {dimension_numbers = #tpu.dot_dimension_numbers<[1], [0], [0], [1], [0, 0, 1, 1], [], []>} : vector<4x4xf32>, vector<4x256xf32>, vector<4x256xf32> -> vector<4x256xf32>
    %cst_11 = arith.constant dense<0.000000e+00> : vector<4x256xf32>
    %16 = tpu.matmul %1, %14, %cst_11 {dimension_numbers = #tpu.dot_dimension_numbers<[1], [0], [0], [1], [0, 0, 1, 1], [], []>} : vector<4x4xf32>, vector<4x256xf32>, vector<4x256xf32> -> vector<4x256xf32>
    %17 = arith.addf %15, %16 : vector<4x256xf32>
    %18 = vector.broadcast %6 : f32 to vector<4x256xf32>
    %19 = arith.mulf %17, %18 : vector<4x256xf32>
    %20 = vector.broadcast %2 : vector<4x1xf32> to vector<4x256xf32>
    %21 = arith.addf %19, %20 : vector<4x256xf32>
    %22 = vector.broadcast %8 : f32 to vector<4x256xf32>
    %23 = arith.mulf %21, %22 : vector<4x256xf32>
    %24 = vector.broadcast %10 : f32 to vector<4x256xf32>
    %25 = arith.mulf %12, %24 : vector<4x256xf32>
    %26 = arith.addf %23, %25 : vector<4x256xf32>
    %c0_12 = arith.constant 0 : index
    %c0_13 = arith.constant 0 : index
    %c0_14 = arith.constant 0 : index
    %c0_15 = arith.constant 0 : index
    %27 = vector.load %arg11[%c0_12, %c0_13, %c0_14, %c0_15] : memref<2x2x4x256xf32, #tpu.memory_space<vmem>>, vector<1x1x4x256xf32>
    %28 = vector.shape_cast %27 : vector<1x1x4x256xf32> to vector<4x256xf32>
    %29 = vector.shape_cast %26 : vector<4x256xf32> to vector<1x1x4x256xf32>
    tpu.vector_store %arg11[%c0_12, %c0_13, %c0_14, %c0_15], %29 {strides = array<i32>} : memref<2x2x4x256xf32, #tpu.memory_space<vmem>>, vector<1x1x4x256xf32>,
    %c0_16 = arith.constant 0 : index
    %c0_17 = arith.constant 0 : index
    %c0_18 = arith.constant 0 : index
    %30 = vector.load %arg6[%c0_16, %c0_17, %c0_18] : memref<2x4x256xf32, #tpu.memory_space<vmem>>, vector<1x4x256xf32>
    %31 = vector.shape_cast %30 : vector<1x4x256xf32> to vector<4x256xf32>
    %c0_19 = arith.constant 0 : index
    %c0_20 = arith.constant 0 : index
    %c0_21 = arith.constant 0 : index
    %32 = vector.load %arg7[%c0_19, %c0_20, %c0_21] : memref<2x4x256xf32, #tpu.memory_space<vmem>>, vector<1x4x256xf32>
    %33 = vector.shape_cast %32 : vector<1x4x256xf32> to vector<4x256xf32>
    %cst_22 = arith.constant dense<0.000000e+00> : vector<4x256xf32>
    %34 = tpu.matmul %0, %31, %cst_22 {dimension_numbers = #tpu.dot_dimension_numbers<[1], [0], [0], [1], [0, 0, 1, 1], [], []>} : vector<4x4xf32>, vector<4x256xf32>, vector<4x256xf32> -> vector<4x256xf32>
    %cst_23 = arith.constant dense<0.000000e+00> : vector<4x256xf32>
    %35 = tpu.matmul %1, %33, %cst_23 {dimension_numbers = #tpu.dot_dimension_numbers<[1], [0], [0], [1], [0, 0, 1, 1], [], []>} : vector<4x4xf32>, vector<4x256xf32>, vector<4x256xf32> -> vector<4x256xf32>
    %36 = arith.addf %34, %35 : vector<4x256xf32>
    %37 = vector.broadcast %6 : f32 to vector<4x256xf32>
    %38 = arith.mulf %36, %37 : vector<4x256xf32>
    %39 = vector.broadcast %2 : vector<4x1xf32> to vector<4x256xf32>
    %40 = arith.addf %38, %39 : vector<4x256xf32>
    %41 = vector.broadcast %8 : f32 to vector<4x256xf32>
    %42 = arith.mulf %40, %41 : vector<4x256xf32>
    %43 = vector.broadcast %10 : f32 to vector<4x256xf32>
    %44 = arith.mulf %31, %43 : vector<4x256xf32>
    %45 = arith.addf %42, %44 : vector<4x256xf32>
    %c1 = arith.constant 1 : index
    %c0_24 = arith.constant 0 : index
    %c0_25 = arith.constant 0 : index
    %c0_26 = arith.constant 0 : index
    %46 = vector.load %arg11[%c1, %c0_24, %c0_25, %c0_26] : memref<2x2x4x256xf32, #tpu.memory_space<vmem>>, vector<1x1x4x256xf32>
    %47 = vector.shape_cast %46 : vector<1x1x4x256xf32> to vector<4x256xf32>
    %48 = vector.shape_cast %45 : vector<4x256xf32> to vector<1x1x4x256xf32>
    tpu.vector_store %arg11[%c1, %c0_24, %c0_25, %c0_26], %48 {strides = array<i32>} : memref<2x2x4x256xf32, #tpu.memory_space<vmem>>, vector<1x1x4x256xf32>,
    %c2_i32_27 = arith.constant 2 : i32
    %49 = arith.muli %arg0, %c2_i32_27 : i32
    %c1_i32 = arith.constant 1 : i32
    %50 = arith.addi %49, %c1_i32 : i32
    %51 = arith.index_cast %50 : i32 to index
    %52 = memref.load %arg1[%51] : memref<4xf32, #tpu.memory_space<smem>>
    %53 = arith.index_cast %50 : i32 to index
    %54 = memref.load %arg2[%53] : memref<4xf32, #tpu.memory_space<smem>>
    %55 = arith.index_cast %50 : i32 to index
    %56 = memref.load %arg3[%55] : memref<4xf32, #tpu.memory_space<smem>>
    %c1_28 = arith.constant 1 : index
    %c0_29 = arith.constant 0 : index
    %c0_30 = arith.constant 0 : index
    %57 = vector.load %arg4[%c1_28, %c0_29, %c0_30] : memref<2x4x256xf32, #tpu.memory_space<vmem>>, vector<1x4x256xf32>
    %58 = vector.shape_cast %57 : vector<1x4x256xf32> to vector<4x256xf32>
    %c1_31 = arith.constant 1 : index
    %c0_32 = arith.constant 0 : index
    %c0_33 = arith.constant 0 : index
    %59 = vector.load %arg5[%c1_31, %c0_32, %c0_33] : memref<2x4x256xf32, #tpu.memory_space<vmem>>, vector<1x4x256xf32>
    %60 = vector.shape_cast %59 : vector<1x4x256xf32> to vector<4x256xf32>
    %cst_34 = arith.constant dense<0.000000e+00> : vector<4x256xf32>
    %61 = tpu.matmul %0, %58, %cst_34 {dimension_numbers = #tpu.dot_dimension_numbers<[1], [0], [0], [1], [0, 0, 1, 1], [], []>} : vector<4x4xf32>, vector<4x256xf32>, vector<4x256xf32> -> vector<4x256xf32>
    %cst_35 = arith.constant dense<0.000000e+00> : vector<4x256xf32>
    %62 = tpu.matmul %1, %60, %cst_35 {dimension_numbers = #tpu.dot_dimension_numbers<[1], [0], [0], [1], [0, 0, 1, 1], [], []>} : vector<4x4xf32>, vector<4x256xf32>, vector<4x256xf32> -> vector<4x256xf32>
    %63 = arith.addf %61, %62 : vector<4x256xf32>
    %64 = vector.broadcast %52 : f32 to vector<4x256xf32>
    %65 = arith.mulf %63, %64 : vector<4x256xf32>
    %66 = vector.broadcast %2 : vector<4x1xf32> to vector<4x256xf32>
    %67 = arith.addf %65, %66 : vector<4x256xf32>
    %68 = vector.broadcast %54 : f32 to vector<4x256xf32>
    %69 = arith.mulf %67, %68 : vector<4x256xf32>
    %70 = vector.broadcast %56 : f32 to vector<4x256xf32>
    %71 = arith.mulf %58, %70 : vector<4x256xf32>
    %72 = arith.addf %69, %71 : vector<4x256xf32>
    %c0_36 = arith.constant 0 : index
    %c1_37 = arith.constant 1 : index
    %c0_38 = arith.constant 0 : index
    %c0_39 = arith.constant 0 : index
    %73 = vector.load %arg11[%c0_36, %c1_37, %c0_38, %c0_39] : memref<2x2x4x256xf32, #tpu.memory_space<vmem>>, vector<1x1x4x256xf32>
    %74 = vector.shape_cast %73 : vector<1x1x4x256xf32> to vector<4x256xf32>
    %75 = vector.shape_cast %72 : vector<4x256xf32> to vector<1x1x4x256xf32>
    tpu.vector_store %arg11[%c0_36, %c1_37, %c0_38, %c0_39], %75 {strides = array<i32>} : memref<2x2x4x256xf32, #tpu.memory_space<vmem>>, vector<1x1x4x256xf32>,
    %c1_40 = arith.constant 1 : index
    %c0_41 = arith.constant 0 : index
    %c0_42 = arith.constant 0 : index
    %76 = vector.load %arg6[%c1_40, %c0_41, %c0_42] : memref<2x4x256xf32, #tpu.memory_space<vmem>>, vector<1x4x256xf32>
    %77 = vector.shape_cast %76 : vector<1x4x256xf32> to vector<4x256xf32>
    %c1_43 = arith.constant 1 : index
    %c0_44 = arith.constant 0 : index
    %c0_45 = arith.constant 0 : index
    %78 = vector.load %arg7[%c1_43, %c0_44, %c0_45] : memref<2x4x256xf32, #tpu.memory_space<vmem>>, vector<1x4x256xf32>
    %79 = vector.shape_cast %78 : vector<1x4x256xf32> to vector<4x256xf32>
    %cst_46 = arith.constant dense<0.000000e+00> : vector<4x256xf32>
    %80 = tpu.matmul %0, %77, %cst_46 {dimension_numbers = #tpu.dot_dimension_numbers<[1], [0], [0], [1], [0, 0, 1, 1], [], []>} : vector<4x4xf32>, vector<4x256xf32>, vector<4x256xf32> -> vector<4x256xf32>
    %cst_47 = arith.constant dense<0.000000e+00> : vector<4x256xf32>
    %81 = tpu.matmul %1, %79, %cst_47 {dimension_numbers = #tpu.dot_dimension_numbers<[1], [0], [0], [1], [0, 0, 1, 1], [], []>} : vector<4x4xf32>, vector<4x256xf32>, vector<4x256xf32> -> vector<4x256xf32>
    %82 = arith.addf %80, %81 : vector<4x256xf32>
    %83 = vector.broadcast %52 : f32 to vector<4x256xf32>
    %84 = arith.mulf %82, %83 : vector<4x256xf32>
    %85 = vector.broadcast %2 : vector<4x1xf32> to vector<4x256xf32>
    %86 = arith.addf %84, %85 : vector<4x256xf32>
    %87 = vector.broadcast %54 : f32 to vector<4x256xf32>
    %88 = arith.mulf %86, %87 : vector<4x256xf32>
    %89 = vector.broadcast %56 : f32 to vector<4x256xf32>
    %90 = arith.mulf %77, %89 : vector<4x256xf32>
    %91 = arith.addf %88, %90 : vector<4x256xf32>
    %c1_48 = arith.constant 1 : index
    %c1_49 = arith.constant 1 : index
    %c0_50 = arith.constant 0 : index
    %c0_51 = arith.constant 0 : index
    %92 = vector.load %arg11[%c1_48, %c1_49, %c0_50, %c0_51] : memref<2x2x4x256xf32, #tpu.memory_space<vmem>>, vector<1x1x4x256xf32>
    %93 = vector.shape_cast %92 : vector<1x1x4x256xf32> to vector<4x256xf32>
    %94 = vector.shape_cast %91 : vector<4x256xf32> to vector<1x1x4x256xf32>
    tpu.vector_store %arg11[%c1_48, %c1_49, %c0_50, %c0_51], %94 {strides = array<i32>} : memref<2x2x4x256xf32, #tpu.memory_space<vmem>>, vector<1x1x4x256xf32>,
    return
  }
  func.func @transform_0(%arg0: i32) -> i32 {
    %c0_i32 = arith.constant 0 : i32
    %c0_i32_0 = arith.constant 0 : i32
    return %c0_i32 : i32
  }
  func.func @transform_1(%arg0: i32) -> i32 {
    %c0_i32 = arith.constant 0 : i32
    %c0_i32_0 = arith.constant 0 : i32
    return %c0_i32 : i32
  }
  func.func @transform_2(%arg0: i32) -> i32 {
    %c0_i32 = arith.constant 0 : i32
    %c0_i32_0 = arith.constant 0 : i32
    return %c0_i32 : i32
  }
  func.func @transform_3(%arg0: i32) -> (i32, i32, i32) {
    %c0_i32 = arith.constant 0 : i32
    %c0_i32_0 = arith.constant 0 : i32
    %c0_i32_1 = arith.constant 0 : i32
    return %arg0, %c0_i32, %c0_i32_0 : i32, i32, i32
  }
  func.func @transform_4(%arg0: i32) -> (i32, i32, i32) {
    %c0_i32 = arith.constant 0 : i32
    %c0_i32_0 = arith.constant 0 : i32
    %c0_i32_1 = arith.constant 0 : i32
    return %arg0, %c0_i32, %c0_i32_0 : i32, i32, i32
  }
  func.func @transform_5(%arg0: i32) -> (i32, i32, i32) {
    %c0_i32 = arith.constant 0 : i32
    %c0_i32_0 = arith.constant 0 : i32
    %c0_i32_1 = arith.constant 0 : i32
    return %arg0, %c0_i32, %c0_i32_0 : i32, i32, i32
  }
  func.func @transform_6(%arg0: i32) -> (i32, i32, i32) {
    %c0_i32 = arith.constant 0 : i32
    %c0_i32_0 = arith.constant 0 : i32
    %c0_i32_1 = arith.constant 0 : i32
    return %arg0, %c0_i32, %c0_i32_0 : i32, i32, i32
  }
  func.func @transform_7(%arg0: i32) -> (i32, i32) {
    %c0_i32 = arith.constant 0 : i32
    %c0_i32_0 = arith.constant 0 : i32
    %c0_i32_1 = arith.constant 0 : i32
    return %c0_i32, %c0_i32_0 : i32, i32
  }
  func.func @transform_8(%arg0: i32) -> (i32, i32) {
    %c0_i32 = arith.constant 0 : i32
    %c0_i32_0 = arith.constant 0 : i32
    %c0_i32_1 = arith.constant 0 : i32
    return %c0_i32, %c0_i32_0 : i32, i32
  }
  func.func @transform_9(%arg0: i32) -> (i32, i32) {
    %c0_i32 = arith.constant 0 : i32
    %c0_i32_0 = arith.constant 0 : i32
    %c0_i32_1 = arith.constant 0 : i32
    return %c0_i32, %c0_i32_0 : i32, i32
  }
  func.func @transform_10(%arg0: i32) -> (i32, i32, i32, i32) {
    %c0_i32 = arith.constant 0 : i32
    %c0_i32_0 = arith.constant 0 : i32
    %c0_i32_1 = arith.constant 0 : i32
    %c0_i32_2 = arith.constant 0 : i32
    return %c0_i32, %arg0, %c0_i32_0, %c0_i32_1 : i32, i32, i32, i32
  }
}

</mosaic_0001>

<llo_original>
// kernel: tpu_custom_call.1
$region0: #{tpu_custom_call.1}
  #allocation0 [shape = 'u32[]', space=smem, size = 0x4, offset = 0x4, fixed_abs, tag = 'smem constant byte address 0x4 - core index']
  #allocation1 [shape = 'u32[72,128]{1,0:T(1,128)}', space=vmem, size = 0x9000, scoped, tag = 'internal scratch']
  #allocation17 [shape = 's32[]', space=sflag, size = 0x4, offset = 0, fixed_abs, tag = 'sflag constant byte address 0x0 - dummy sync flag']
  %s0 = inlined_call_operand.vmem [shape: f32[4], index: 0, kind: input, shape index: {}]
  %s1 = inlined_call_operand.hbm [shape: f32[4], index: 1, kind: input, shape index: {}]
  %s2 = inlined_call_operand.hbm [shape: f32[4], index: 2, kind: input, shape index: {}]
  %s3 = inlined_call_operand.hbm [shape: f32[4,4,256], index: 3, kind: input, shape index: {}]
  %s4 = inlined_call_operand.hbm [shape: f32[4,4,256], index: 4, kind: input, shape index: {}]
  %s5 = inlined_call_operand.hbm [shape: f32[4,4,256], index: 5, kind: input, shape index: {}]
  %s6 = inlined_call_operand.hbm [shape: f32[4,4,256], index: 6, kind: input, shape index: {}]
  %s7 = inlined_call_operand.vmem [shape: f32[4,4], index: 7, kind: input, shape index: {}]
  %s8 = inlined_call_operand.vmem [shape: f32[4,4], index: 8, kind: input, shape index: {}]
  %s9 = inlined_call_operand.vmem [shape: f32[4,1], index: 9, kind: input, shape index: {}]
  %s10 = inlined_call_operand.hbm [shape: f32[2,4,4,256], index: 10, kind: output, shape index: {}]
  %s11 = sld [smem:[#allocation0]]
  $region101: #{tpu_custom_call.1} parent=0
    _
  %s13 = ssub.s32 1, %s11
  %s14 = scalar_select 0, %s13, %s11
  $region1: #{tpu_custom_call.1} parent=0
    #allocation2 [shape = 'u8[512]{0}', space=smem, size = 0x200, scoped, tag = 'input window, operand 0, single buffered']
    #allocation3 [shape = 's32[2]{0}', space=sflag, size = 0x8, scoped, tag = 'scoped memory for tpu_custom_call.1']
    #allocation4 [shape = 's32[2]{0}', space=sflag, size = 0x8, scoped, tag = 'scoped memory for tpu_custom_call.1']
    #allocation5 [shape = 's32[2]{0}', space=sflag, size = 0x8, scoped, tag = 'scoped memory for tpu_custom_call.1']
    #allocation6 [shape = 's32[2]{0}', space=sflag, size = 0x8, scoped, tag = 'scoped memory for tpu_custom_call.1']
    #allocation7 [shape = 'u8[512]{0}', space=smem, size = 0x200, scoped, tag = 'input window, operand 1, single buffered']
    #allocation8 [shape = 'u8[512]{0}', space=smem, size = 0x200, scoped, tag = 'input window, operand 2, single buffered']
    #allocation9 [shape = 's32[1]{0}', space=sflag, size = 0x4, scoped, tag = 'scoped memory for tpu_custom_call.1']
    #allocation10 [shape = 'u8[16384]{0}', space=vmem, size = 0x4000, scoped, tag = 'input window, operand 3']
    #allocation11 [shape = 'u8[16384]{0}', space=vmem, size = 0x4000, scoped, tag = 'input window, operand 4']
    #allocation12 [shape = 's32[2]{0}', space=sflag, size = 0x8, scoped, tag = 'scoped memory for tpu_custom_call.1']
    #allocation13 [shape = 'u8[16384]{0}', space=vmem, size = 0x4000, scoped, tag = 'input window, operand 5']
    #allocation14 [shape = 'u8[16384]{0}', space=vmem, size = 0x4000, scoped, tag = 'input window, operand 6']
    #allocation15 [shape = 's32[2]{0}', space=sflag, size = 0x8, scoped, tag = 'scoped memory for tpu_custom_call.1']
    #allocation16 [shape = 'u8[32768]{0}', space=vmem, size = 0x8000, scoped, tag = 'output window, operand 0']
    %15 = vsyncpa [#allocation6], 0
    %16 = vsyncpa [#allocation5], 0
    %17 = vsyncpa [#allocation9], 0
    %18 = vsyncpa [#allocation3], 0
    %s19 = scalar_lea.sflag [#allocation3], 1
    %20 = vsyncpa %s19, 0
    %21 = vsyncpa [#allocation12], 0
    %s22 = scalar_lea.sflag [#allocation12], 1
    %23 = vsyncpa %s22, 0
    %24 = vsyncpa [#allocation15], 0
    %s25 = scalar_lea.sflag [#allocation15], 1
    %26 = vsyncpa %s25, 0
    %27 = vsyncpa [#allocation4], 0
    %s28 = scalar_lea.sflag [#allocation4], 1
    %29 = vsyncpa %s28, 0
    loop: start=0, step=1, limit=4
    $region2: #{tpu_custom_call.1} parent=1 // loop_pre_header
      _
    $region3: #{tpu_custom_call.1} parent=1 // loop_header
      %s31 = sphi 0, %s35
      %p32 = scmp.ge.s32.totalorder %s31, 4
      %s39 = sphi 0, %s39
      %s41 = sphi 0, %s39
      %s42 = sphi 0, %s41
      %s56 = sphi 0, %s42
      %s60 = sphi 0, %s60
      %s62 = sphi 0, %s60
      %s63 = sphi 0, %s62
      %s77 = sphi 0, %s63
      %s81 = sphi 0, %s81
      %s83 = sphi 0, %s81
      %s84 = sphi 0, %s83
      %s98 = sphi 0, %s84
      %s104 = sphi 0, %s106
      %s107 = sphi 0, %s104
      %s108 = sphi 0, %s107
      %s124 = sphi 0, %s108
      %s130 = sphi 0, %s132
      %s133 = sphi 0, %s130
      %s134 = sphi 0, %s133
      %s150 = sphi 0, %s134
      %s156 = sphi 0, %s158
      %s159 = sphi 0, %s156
      %s160 = sphi 0, %s159
      %s176 = sphi 0, %s160
      %s182 = sphi 0, %s184
      %s185 = sphi 0, %s182
      %s186 = sphi 0, %s185
      %s202 = sphi 0, %s186
      %s206 = sphi 0, %s206
      %s208 = sphi 0, %s206
      %s209 = sphi 0, %s208
      %s223 = sphi 0, %s209
      %s227 = sphi 0, %s227
      %s229 = sphi 0, %s227
      %s230 = sphi 0, %s229
      %s244 = sphi 0, %s230
      %s248 = sphi 0, %s248
      %s250 = sphi 0, %s248
      %s251 = sphi 0, %s250
      %s265 = sphi 0, %s251
      %s271 = sphi 0, %s273
      %s274 = sphi 0, %s271
      %s275 = sphi 0, %s274
      %s291 = sphi 0, %s275
    $region4: #{tpu_custom_call.1} parent=1 // loop_header_branch
      %34 = sbr.rel (%p32) target = $region8
    $region5: #{tpu_custom_call.1} parent=1 // loop_body
      %s36 = ssub.s32 %s31, 1
      %s37 = ssub.s32 %s31, 2
      %s38 = sadd.s32 %s31, 1
      %s40 = sadd.s32 %s39, 1
      %p43 = scmp.eq.s32.totalorder %s31, 1
      %p44 = scmp.ne.s32.totalorder %s39, %s41
      %p45 = scmp.eq.s32.totalorder %s31, 0
      %p46 = por %p44, %p45
      %p47 = scmp.ne.s32.totalorder %s39, %s41
      %p48 = scmp.eq.s32.totalorder %s36, 1
      %p49 = por %p47, %p48
      %p50 = scmp.ne.s32.totalorder %s41, %s42
      %p51 = scmp.eq.s32.totalorder %s36, 0
      %p52 = por %p50, %p51
      %p53 = scmp.ne.s32.totalorder %s41, %s42
      %p54 = scmp.eq.s32.totalorder %s37, 1
      %p55 = por %p53, %p54
      %p57 = scmp.ne.s32.totalorder %s42, %s56
      %p58 = scmp.eq.s32.totalorder %s37, 0
      %p59 = por %p57, %p58
      %s61 = sadd.s32 %s60, 1
      %p64 = scmp.eq.s32.totalorder %s31, 1
      %p65 = scmp.ne.s32.totalorder %s60, %s62
      %p66 = scmp.eq.s32.totalorder %s31, 0
      %p67 = por %p65, %p66
      %p68 = scmp.ne.s32.totalorder %s60, %s62
      %p69 = scmp.eq.s32.totalorder %s36, 1
      %p70 = por %p68, %p69
      %p71 = scmp.ne.s32.totalorder %s62, %s63
      %p72 = scmp.eq.s32.totalorder %s36, 0
      %p73 = por %p71, %p72
      %p74 = scmp.ne.s32.totalorder %s62, %s63
      %p75 = scmp.eq.s32.totalorder %s37, 1
      %p76 = por %p74, %p75
      %p78 = scmp.ne.s32.totalorder %s63, %s77
      %p79 = scmp.eq.s32.totalorder %s37, 0
      %p80 = por %p78, %p79
      %s82 = sadd.s32 %s81, 1
      %p85 = scmp.eq.s32.totalorder %s31, 1
      %p86 = scmp.ne.s32.totalorder %s81, %s83
      %p87 = scmp.eq.s32.totalorder %s31, 0
      %p88 = por %p86, %p87
      %p89 = scmp.ne.s32.totalorder %s81, %s83
      %p90 = scmp.eq.s32.totalorder %s36, 1
      %p91 = por %p89, %p90
      %p92 = scmp.ne.s32.totalorder %s83, %s84
      %p93 = scmp.eq.s32.totalorder %s36, 0
      %p94 = por %p92, %p93
      %p95 = scmp.ne.s32.totalorder %s83, %s84
      %p96 = scmp.eq.s32.totalorder %s37, 1
      %p97 = por %p95, %p96
      %p99 = scmp.ne.s32.totalorder %s84, %s98
      %p100 = scmp.eq.s32.totalorder %s37, 0
      %p101 = por %p99, %p100
      %s102 = ssub.s32 %s31, %s38
      %p103 = scmp.eq.s32.totalorder %s102, 0
      %s105 = sadd.s32 %s104, 1
      %s106 = scalar_select %p103, %s104, %s105
      %p109 = pneg %p103
      %p110 = scmp.eq.s32.totalorder %s31, 1
      %p111 = por %p109, %p110
      %p112 = scmp.ne.s32.totalorder %s104, %s107
      %p113 = scmp.eq.s32.totalorder %s31, 0
      %p114 = por %p112, %p113
      %p115 = scmp.ne.s32.totalorder %s104, %s107
      %p116 = scmp.eq.s32.totalorder %s36, 1
      %p117 = por %p115, %p116
      %p118 = scmp.ne.s32.totalorder %s107, %s108
      %p119 = scmp.eq.s32.totalorder %s36, 0
      %p120 = por %p118, %p119
      %p121 = scmp.ne.s32.totalorder %s107, %s108
      %p122 = scmp.eq.s32.totalorder %s37, 1
      %p123 = por %p121, %p122
      %p125 = scmp.ne.s32.totalorder %s108, %s124
      %p126 = scmp.eq.s32.totalorder %s37, 0
      %p127 = por %p125, %p126
      %s128 = ssub.s32 %s31, %s38
      %p129 = scmp.eq.s32.totalorder %s128, 0
      %s131 = sadd.s32 %s130, 1
      %s132 = scalar_select %p129, %s130, %s131
      %p135 = pneg %p129
      %p136 = scmp.eq.s32.totalorder %s31, 1
      %p137 = por %p135, %p136
      %p138 = scmp.ne.s32.totalorder %s130, %s133
      %p139 = scmp.eq.s32.totalorder %s31, 0
      %p140 = por %p138, %p139
      %p141 = scmp.ne.s32.totalorder %s130, %s133
      %p142 = scmp.eq.s32.totalorder %s36, 1
      %p143 = por %p141, %p142
      %p144 = scmp.ne.s32.totalorder %s133, %s134
      %p145 = scmp.eq.s32.totalorder %s36, 0
      %p146 = por %p144, %p145
      %p147 = scmp.ne.s32.totalorder %s133, %s134
      %p148 = scmp.eq.s32.totalorder %s37, 1
      %p149 = por %p147, %p148
      %p151 = scmp.ne.s32.totalorder %s134, %s150
      %p152 = scmp.eq.s32.totalorder %s37, 0
      %p153 = por %p151, %p152
      %s154 = ssub.s32 %s31, %s38
      %p155 = scmp.eq.s32.totalorder %s154, 0
      %s157 = sadd.s32 %s156, 1
      %s158 = scalar_select %p155, %s156, %s157
      %p161 = pneg %p155
      %p162 = scmp.eq.s32.totalorder %s31, 1
      %p163 = por %p161, %p162
      %p164 = scmp.ne.s32.totalorder %s156, %s159
      %p165 = scmp.eq.s32.totalorder %s31, 0
      %p166 = por %p164, %p165
      %p167 = scmp.ne.s32.totalorder %s156, %s159
      %p168 = scmp.eq.s32.totalorder %s36, 1
      %p169 = por %p167, %p168
      %p170 = scmp.ne.s32.totalorder %s159, %s160
      %p171 = scmp.eq.s32.totalorder %s36, 0
      %p172 = por %p170, %p171
      %p173 = scmp.ne.s32.totalorder %s159, %s160
      %p174 = scmp.eq.s32.totalorder %s37, 1
      %p175 = por %p173, %p174
      %p177 = scmp.ne.s32.totalorder %s160, %s176
      %p178 = scmp.eq.s32.totalorder %s37, 0
      %p179 = por %p177, %p178
      %s180 = ssub.s32 %s31, %s38
      %p181 = scmp.eq.s32.totalorder %s180, 0
      %s183 = sadd.s32 %s182, 1
      %s184 = scalar_select %p181, %s182, %s183
      %p187 = pneg %p181
      %p188 = scmp.eq.s32.totalorder %s31, 1
      %p189 = por %p187, %p188
      %p190 = scmp.ne.s32.totalorder %s182, %s185
      %p191 = scmp.eq.s32.totalorder %s31, 0
      %p192 = por %p190, %p191
      %p193 = scmp.ne.s32.totalorder %s182, %s185
      %p194 = scmp.eq.s32.totalorder %s36, 1
      %p195 = por %p193, %p194
      %p196 = scmp.ne.s32.totalorder %s185, %s186
      %p197 = scmp.eq.s32.totalorder %s36, 0
      %p198 = por %p196, %p197
      %p199 = scmp.ne.s32.totalorder %s185, %s186
      %p200 = scmp.eq.s32.totalorder %s37, 1
      %p201 = por %p199, %p200
      %p203 = scmp.ne.s32.totalorder %s186, %s202
      %p204 = scmp.eq.s32.totalorder %s37, 0
      %p205 = por %p203, %p204
      %s207 = sadd.s32 %s206, 1
      %p210 = scmp.eq.s32.totalorder %s31, 1
      %p211 = scmp.ne.s32.totalorder %s206, %s208
      %p212 = scmp.eq.s32.totalorder %s31, 0
      %p213 = por %p211, %p212
      %p214 = scmp.ne.s32.totalorder %s206, %s208
      %p215 = scmp.eq.s32.totalorder %s36, 1
      %p216 = por %p214, %p215
      %p217 = scmp.ne.s32.totalorder %s208, %s209
      %p218 = scmp.eq.s32.totalorder %s36, 0
      %p219 = por %p217, %p218
      %p220 = scmp.ne.s32.totalorder %s208, %s209
      %p221 = scmp.eq.s32.totalorder %s37, 1
      %p222 = por %p220, %p221
      %p224 = scmp.ne.s32.totalorder %s209, %s223
      %p225 = scmp.eq.s32.totalorder %s37, 0
      %p226 = por %p224, %p225
      %s228 = sadd.s32 %s227, 1
      %p231 = scmp.eq.s32.totalorder %s31, 1
      %p232 = scmp.ne.s32.totalorder %s227, %s229
      %p233 = scmp.eq.s32.totalorder %s31, 0
      %p234 = por %p232, %p233
      %p235 = scmp.ne.s32.totalorder %s227, %s229
      %p236 = scmp.eq.s32.totalorder %s36, 1
      %p237 = por %p235, %p236
      %p238 = scmp.ne.s32.totalorder %s229, %s230
      %p239 = scmp.eq.s32.totalorder %s36, 0
      %p240 = por %p238, %p239
      %p241 = scmp.ne.s32.totalorder %s229, %s230
      %p242 = scmp.eq.s32.totalorder %s37, 1
      %p243 = por %p241, %p242
      %p245 = scmp.ne.s32.totalorder %s230, %s244
      %p246 = scmp.eq.s32.totalorder %s37, 0
      %p247 = por %p245, %p246
      %s249 = sadd.s32 %s248, 1
      %p252 = scmp.eq.s32.totalorder %s31, 1
      %p253 = scmp.ne.s32.totalorder %s248, %s250
      %p254 = scmp.eq.s32.totalorder %s31, 0
      %p255 = por %p253, %p254
      %p256 = scmp.ne.s32.totalorder %s248, %s250
      %p257 = scmp.eq.s32.totalorder %s36, 1
      %p258 = por %p256, %p257
      %p259 = scmp.ne.s32.totalorder %s250, %s251
      %p260 = scmp.eq.s32.totalorder %s36, 0
      %p261 = por %p259, %p260
      %p262 = scmp.ne.s32.totalorder %s250, %s251
      %p263 = scmp.eq.s32.totalorder %s37, 1
      %p264 = por %p262, %p263
      %p266 = scmp.ne.s32.totalorder %s251, %s265
      %p267 = scmp.eq.s32.totalorder %s37, 0
      %p268 = por %p266, %p267
      %s269 = ssub.s32 %s31, %s38
      %p270 = scmp.eq.s32.totalorder %s269, 0
      %s272 = sadd.s32 %s271, 1
      %s273 = scalar_select %p270, %s271, %s272
      %p276 = pneg %p270
      %p277 = scmp.eq.s32.totalorder %s31, 1
      %p278 = por %p276, %p277
      %p279 = scmp.ne.s32.totalorder %s271, %s274
      %p280 = scmp.eq.s32.totalorder %s31, 0
      %p281 = por %p279, %p280
      %p282 = scmp.ne.s32.totalorder %s271, %s274
      %p283 = scmp.eq.s32.totalorder %s36, 1
      %p284 = por %p282, %p283
      %p285 = scmp.ne.s32.totalorder %s274, %s275
      %p286 = scmp.eq.s32.totalorder %s36, 0
      %p287 = por %p285, %p286
      %p288 = scmp.ne.s32.totalorder %s274, %s275
      %p289 = scmp.eq.s32.totalorder %s37, 1
      %p290 = por %p288, %p289
      %p292 = scmp.ne.s32.totalorder %s275, %s291
      %p293 = scmp.eq.s32.totalorder %s37, 0
      %p294 = por %p292, %p293
      %p295 = scmp.le.s32.totalorder 1, %s31
      %p296 = scmp.lt.s32.totalorder %s31, 3
      %p297 = pnand %p295, %p296
      %p298 = pneg %p297
      // Predicated region
      $region9: #{tpu_custom_call.1} parent=5 // pred_check
        _
      $region10: #{tpu_custom_call.1} parent=5 // pred_check_branch
        %300 = sbr.rel (%p297) target = $region12
      $region11: #{tpu_custom_call.1} parent=5 // pred_region
        %s301 = ssub.s32 %s31, 1
        // Predicated region
        $region13: #{tpu_custom_call.1} parent=11 // pred_check
          %p302 = pneg %p52
        $region14: #{tpu_custom_call.1} parent=11 // pred_check_branch
          %304 = sbr.rel (%p302) target = $region16
        $region15: #{tpu_custom_call.1} parent=11 // pred_region
          %306 = vsyncadd [#allocation6], 0
          %s308 = sshll.u32 %s0, 4
          %s309 = int_to_ptr.vmem [resolvable:$true] %s308
          %311 = dma.vmem_to_smem %s309, 16, [#allocation2], [#allocation6]
        $region16: #{tpu_custom_call.1} parent=11 // pred_fallthru
          _
        // Predicated region
        $region17: #{tpu_custom_call.1} parent=11 // pred_check
          %p312 = pneg %p73
        $region18: #{tpu_custom_call.1} parent=11 // pred_check_branch
          %314 = sbr.rel (%p312) target = $region20
        $region19: #{tpu_custom_call.1} parent=11 // pred_region
          %316 = vsyncadd [#allocation5], 0
          %s318 = sshll.u32 %s1, 4
          %s319 = int_to_ptr.hbm [resolvable:$true] %s318
          %321 = dma.hbm_to_smem %s319, 16, [#allocation7], [#allocation5]
        $region20: #{tpu_custom_call.1} parent=11 // pred_fallthru
          _
        // Predicated region
        $region21: #{tpu_custom_call.1} parent=11 // pred_check
          %p322 = pneg %p94
        $region22: #{tpu_custom_call.1} parent=11 // pred_check_branch
          %324 = sbr.rel (%p322) target = $region24
        $region23: #{tpu_custom_call.1} parent=11 // pred_region
          %326 = vsyncadd [#allocation9], 0
          %s328 = sshll.u32 %s2, 4
          %s329 = int_to_ptr.hbm [resolvable:$true] %s328
          %331 = dma.hbm_to_smem %s329, 16, [#allocation8], [#allocation9]
        $region24: #{tpu_custom_call.1} parent=11 // pred_fallthru
          _
        // Predicated region
        $region25: #{tpu_custom_call.1} parent=11 // pred_check
          %p332 = pneg %p219
        $region26: #{tpu_custom_call.1} parent=11 // pred_check_branch
          %334 = sbr.rel (%p332) target = $region28
        $region27: #{tpu_custom_call.1} parent=11 // pred_region
          _
        $region28: #{tpu_custom_call.1} parent=11 // pred_fallthru
          _
        // Predicated region
        $region29: #{tpu_custom_call.1} parent=11 // pred_check
          %p335 = pneg %p240
        $region30: #{tpu_custom_call.1} parent=11 // pred_check_branch
          %337 = sbr.rel (%p335) target = $region32
        $region31: #{tpu_custom_call.1} parent=11 // pred_region
          _
        $region32: #{tpu_custom_call.1} parent=11 // pred_fallthru
          _
        // Predicated region
        $region33: #{tpu_custom_call.1} parent=11 // pred_check
          %p338 = pneg %p261
        $region34: #{tpu_custom_call.1} parent=11 // pred_check_branch
          %340 = sbr.rel (%p338) target = $region36
        $region35: #{tpu_custom_call.1} parent=11 // pred_region
          _
        $region36: #{tpu_custom_call.1} parent=11 // pred_fallthru
          _
      $region12: #{tpu_custom_call.1} parent=5 // pred_fallthru
        _
      %p341 = scmp.lt.s32.totalorder %s31, 2
      // Predicated region
      $region37: #{tpu_custom_call.1} parent=5 // pred_check
        %p342 = pneg %p341
      $region38: #{tpu_custom_call.1} parent=5 // pred_check_branch
        %344 = sbr.rel (%p342) target = $region40
      $region39: #{tpu_custom_call.1} parent=5 // pred_region
        // Predicated region
        $region41: #{tpu_custom_call.1} parent=39 // pred_check
          %p345 = pneg %p114
        $region42: #{tpu_custom_call.1} parent=39 // pred_check_branch
          %347 = sbr.rel (%p345) target = $region44
        $region43: #{tpu_custom_call.1} parent=39 // pred_region
          %s348 = sand.u32 %s104, 1
          %s349 = scalar_lea.sflag [#allocation3], %s348
          %s350 = sand.u32 %s104, 1
          %s351 = smul.addr %s350, 16
          %s352 = scalar_lea.vmem [#allocation10], %s351
          %s353 = smul.u32 2, %s31
          %355 = vsyncadd %s349, 0
          %s356 = smul.addr %s353, 2
          %s357 = smul.addr %s356, 4
          %s358 = scalar_lea.hbm %s3, %s357
          %s359 = sshll.u32 %s358, 4
          %s360 = int_to_ptr.hbm [resolvable:$true] %s359
          %s361 = sshll.u32 %s352, 4
          %s362 = int_to_ptr.vmem [resolvable:$true] %s361
          %367 = dma.hbm_to_vmem [thread:$0]  %s360, 256, %s362, %s349, 128, 128, 8
        $region44: #{tpu_custom_call.1} parent=39 // pred_fallthru
          _
        // Predicated region
        $region45: #{tpu_custom_call.1} parent=39 // pred_check
          %p368 = pneg %p140
        $region46: #{tpu_custom_call.1} parent=39 // pred_check_branch
          %370 = sbr.rel (%p368) target = $region48
        $region47: #{tpu_custom_call.1} parent=39 // pred_region
          %s371 = sand.u32 %s31, 1
          %s372 = scalar_lea.sflag [#allocation12], %s371
          %s373 = sand.u32 %s130, 1
          %s374 = smul.addr %s373, 16
          %s375 = scalar_lea.vmem [#allocation11], %s374
          %s376 = smul.u32 2, %s31
          %378 = vsyncadd %s372, 0
          %s379 = smul.addr %s376, 2
          %s380 = smul.addr %s379, 4
          %s381 = scalar_lea.hbm %s4, %s380
          %s382 = sshll.u32 %s381, 4
          %s383 = int_to_ptr.hbm [resolvable:$true] %s382
          %s384 = sshll.u32 %s375, 4
          %s385 = int_to_ptr.vmem [resolvable:$true] %s384
          %390 = dma.hbm_to_vmem [thread:$0]  %s383, 256, %s385, %s372, 128, 128, 8
        $region48: #{tpu_custom_call.1} parent=39 // pred_fallthru
          _
        // Predicated region
        $region49: #{tpu_custom_call.1} parent=39 // pred_check
          %p391 = pneg %p166
        $region50: #{tpu_custom_call.1} parent=39 // pred_check_branch
          %393 = sbr.rel (%p391) target = $region52
        $region51: #{tpu_custom_call.1} parent=39 // pred_region
          %s394 = sand.u32 %s31, 1
          %s395 = scalar_lea.sflag [#allocation12], %s394
          %s396 = sand.u32 %s156, 1
          %s397 = smul.addr %s396, 16
          %s398 = scalar_lea.vmem [#allocation13], %s397
          %s399 = smul.u32 2, %s31
          %401 = vsyncadd %s395, 0
          %s402 = smul.addr %s399, 2
          %s403 = smul.addr %s402, 4
          %s404 = scalar_lea.hbm %s5, %s403
          %s405 = sshll.u32 %s404, 4
          %s406 = int_to_ptr.hbm [resolvable:$true] %s405
          %s407 = sshll.u32 %s398, 4
          %s408 = int_to_ptr.vmem [resolvable:$true] %s407
          %413 = dma.hbm_to_vmem [thread:$0]  %s406, 256, %s408, %s395, 128, 128, 8
        $region52: #{tpu_custom_call.1} parent=39 // pred_fallthru
          _
        // Predicated region
        $region53: #{tpu_custom_call.1} parent=39 // pred_check
          %p414 = pneg %p192
        $region54: #{tpu_custom_call.1} parent=39 // pred_check_branch
          %416 = sbr.rel (%p414) target = $region56
        $region55: #{tpu_custom_call.1} parent=39 // pred_region
          %s417 = sand.u32 %s182, 1
          %s418 = scalar_lea.sflag [#allocation15], %s417
          %s419 = sand.u32 %s182, 1
          %s420 = smul.addr %s419, 16
          %s421 = scalar_lea.vmem [#allocation14], %s420
          %s422 = smul.u32 2, %s31
          %424 = vsyncadd %s418, 0
          %s425 = smul.addr %s422, 2
          %s426 = smul.addr %s425, 4
          %s427 = scalar_lea.hbm %s6, %s426
          %s428 = sshll.u32 %s427, 4
          %s429 = int_to_ptr.hbm [resolvable:$true] %s428
          %s430 = sshll.u32 %s421, 4
          %s431 = int_to_ptr.vmem [resolvable:$true] %s430
          %436 = dma.hbm_to_vmem [thread:$0]  %s429, 256, %s431, %s418, 128, 128, 8
        $region56: #{tpu_custom_call.1} parent=39 // pred_fallthru
          _
      $region40: #{tpu_custom_call.1} parent=5 // pred_fallthru
        _
      %p437 = scmp.le.s32.totalorder 1, %s31
      %p438 = scmp.lt.s32.totalorder %s31, 3
      %p439 = pnand %p437, %p438
      %p440 = pneg %p439
      // Predicated region
      $region57: #{tpu_custom_call.1} parent=5 // pred_check
        _
      $region58: #{tpu_custom_call.1} parent=5 // pred_check_branch
        %442 = sbr.rel (%p439) target = $region60
      $region59: #{tpu_custom_call.1} parent=5 // pred_region
        %s443 = ssub.s32 %s31, 1
        // Predicated region
        $region61: #{tpu_custom_call.1} parent=59 // pred_check
          %p444 = pneg %p52
        $region62: #{tpu_custom_call.1} parent=59 // pred_check_branch
          %446 = sbr.rel (%p444) target = $region64
        $region63: #{tpu_custom_call.1} parent=59 // pred_region
          %448 = dma.done [#allocation6], 16
        $region64: #{tpu_custom_call.1} parent=59 // pred_fallthru
          _
        // Predicated region
        $region65: #{tpu_custom_call.1} parent=59 // pred_check
          %p449 = pneg %p73
        $region66: #{tpu_custom_call.1} parent=59 // pred_check_branch
          %451 = sbr.rel (%p449) target = $region68
        $region67: #{tpu_custom_call.1} parent=59 // pred_region
          %453 = dma.done [#allocation5], 16
        $region68: #{tpu_custom_call.1} parent=59 // pred_fallthru
          _
        // Predicated region
        $region69: #{tpu_custom_call.1} parent=59 // pred_check
          %p454 = pneg %p94
        $region70: #{tpu_custom_call.1} parent=59 // pred_check_branch
          %456 = sbr.rel (%p454) target = $region72
        $region71: #{tpu_custom_call.1} parent=59 // pred_region
          %458 = dma.done [#allocation9], 16
        $region72: #{tpu_custom_call.1} parent=59 // pred_fallthru
          _
        %s459 = sand.u32 %s107, 1
        %s460 = scalar_lea.sflag [#allocation3], %s459
        %s461 = sand.u32 %s107, 1
        %s462 = smul.addr %s461, 16
        %s463 = scalar_lea.vmem [#allocation10], %s462
        // Predicated region
        $region73: #{tpu_custom_call.1} parent=59 // pred_check
          %p464 = pneg %p120
        $region74: #{tpu_custom_call.1} parent=59 // pred_check_branch
          %466 = sbr.rel (%p464) target = $region76
        $region75: #{tpu_custom_call.1} parent=59 // pred_region
          %468 = dma.done %s460, 256
        $region76: #{tpu_custom_call.1} parent=59 // pred_fallthru
          _
        %s469 = sand.u32 %s36, 1
        %s470 = scalar_lea.sflag [#allocation12], %s469
        %s471 = sand.u32 %s133, 1
        %s472 = smul.addr %s471, 16
        %s473 = scalar_lea.vmem [#allocation11], %s472
        // Predicated region
        $region77: #{tpu_custom_call.1} parent=59 // pred_check
          %p474 = pneg %p146
        $region78: #{tpu_custom_call.1} parent=59 // pred_check_branch
          %476 = sbr.rel (%p474) target = $region80
        $region79: #{tpu_custom_call.1} parent=59 // pred_region
          %478 = dma.done %s470, 256
        $region80: #{tpu_custom_call.1} parent=59 // pred_fallthru
          _
        %s479 = sand.u32 %s36, 1
        %s480 = scalar_lea.sflag [#allocation12], %s479
        %s481 = sand.u32 %s159, 1
        %s482 = smul.addr %s481, 16
        %s483 = scalar_lea.vmem [#allocation13], %s482
        // Predicated region
        $region81: #{tpu_custom_call.1} parent=59 // pred_check
          %p484 = pneg %p172
        $region82: #{tpu_custom_call.1} parent=59 // pred_check_branch
          %486 = sbr.rel (%p484) target = $region84
        $region83: #{tpu_custom_call.1} parent=59 // pred_region
          %488 = dma.done %s480, 256
        $region84: #{tpu_custom_call.1} parent=59 // pred_fallthru
          _
        %s489 = sand.u32 %s185, 1
        %s490 = scalar_lea.sflag [#allocation15], %s489
        %s491 = sand.u32 %s185, 1
        %s492 = smul.addr %s491, 16
        %s493 = scalar_lea.vmem [#allocation14], %s492
        // Predicated region
        $region85: #{tpu_custom_call.1} parent=59 // pred_check
          %p494 = pneg %p198
        $region86: #{tpu_custom_call.1} parent=59 // pred_check_branch
          %496 = sbr.rel (%p494) target = $region88
        $region87: #{tpu_custom_call.1} parent=59 // pred_region
          %498 = dma.done %s490, 256
        $region88: #{tpu_custom_call.1} parent=59 // pred_fallthru
          _
        %499 = sfence
        %p500 = pneg %p52
        %p501 = pneg %p49
        %p502 = pneg %p73
        %p503 = pneg %p70
        %p504 = pneg %p94
        %p505 = pneg %p91
        %s506 = sand.u32 %s107, 1
        %s507 = scalar_lea.sflag [#allocation3], %s506
        %s508 = sand.u32 %s107, 1
        %s509 = smul.addr %s508, 16
        %s510 = scalar_lea.vmem [#allocation10], %s509
        %p511 = pneg %p120
        %p512 = pneg %p117
        %s513 = sand.u32 %s36, 1
        %s514 = scalar_lea.sflag [#allocation12], %s513
        %s515 = sand.u32 %s133, 1
        %s516 = smul.addr %s515, 16
        %s517 = scalar_lea.vmem [#allocation11], %s516
        %p518 = pneg %p146
        %p519 = pneg %p143
        %s520 = sand.u32 %s36, 1
        %s521 = scalar_lea.sflag [#allocation12], %s520
        %s522 = sand.u32 %s159, 1
        %s523 = smul.addr %s522, 16
        %s524 = scalar_lea.vmem [#allocation13], %s523
        %p525 = pneg %p172
        %p526 = pneg %p169
        %s527 = sand.u32 %s185, 1
        %s528 = scalar_lea.sflag [#allocation15], %s527
        %s529 = sand.u32 %s185, 1
        %s530 = smul.addr %s529, 16
        %s531 = scalar_lea.vmem [#allocation14], %s530
        %p532 = pneg %p198
        %p533 = pneg %p195
        %p534 = pneg %p219
        %p535 = pneg %p216
        %p536 = pneg %p240
        %p537 = pneg %p237
        %p538 = pneg %p261
        %p539 = pneg %p258
        %p540 = pneg %p287
        %p541 = pneg %p284
        %s542 = sand.u32 %s274, 1
        %s543 = scalar_lea.sflag [#allocation4], %s542
        %s544 = sand.u32 %s274, 1
        %s545 = smul.addr %s544, 32
        %s546 = scalar_lea.vmem [#allocation16], %s545
        %s547 = smul.u32 2, %s36
        %s548 = smul.u32 2, %s36
        %s549 = smul.u32 2, %s36
        %s550 = smul.u32 2, %s36
        %s551 = smul.u32 2, %s36
        %v552 = vld [vmem:[%s7] sm:$0xf]
        %v553 = vld [vmem:[%s8] sm:$0xf]
        %v554 = vld [vmem:[%s9] sm:$0xf]
        %s555 = smul.u32 %s36, 2
        %s556 = sld [smem:[#allocation2 + %s555]]
        %s557 = sld [smem:[#allocation7 + %s555]]
        %s558 = sld [smem:[#allocation8 + %s555]]
        %v559 = vld [vmem:[%s463] sm:$0xff]
        %v560 = vld [vmem:[%s473] sm:$0xff]
        %562 = vst [vmem:[#allocation1] ss:$2 sm:$0xff] %v560
        %v563 = vld.sshfl [vmem:[#allocation1] sm:$0xff pattern:$0x75316420]
        %v564 = vld.sshfl [vmem:[#allocation1 + $0x8] sm:$0xff pattern:$0x75316420]
        %vm565 = vcmask 31744
        %v567 = vsel %vm565, %v553, 0
        %vm569 = vcmask 1043456
        %v570 = vsel %vm569, %v563, 0
        %v572 = vsel %vm569, %v564, 0
        %574 = vmatpush.msra.mxu0 0.0
        %575 = vmatpush.msra.mxu0 0.0
        %576 = vmatpush.msra.mxu0 0.0
        %577 = vmatpush.msra.mxu0 0.0
        %578 = vmatpush.msra.mxu0 0.0
        %579 = vmatpush.msra.mxu0 0.0
        %580 = vmatpush.msra.mxu0 0.0
        %581 = vmatpush.msra.mxu0 0.0
        %582 = vmatpush.msra.mxu0 0.0
        %583 = vmatpush.msra.mxu0 0.0
        %584 = vmatpush.msra.mxu0 0.0
        %585 = vmatpush.msra.mxu0 0.0
        %586 = vmatpush.msra.mxu0 0.0
        %587 = vmatpush.msra.mxu0 0.0
        %588 = vmatpush.msra.mxu0 0.0
        %589 = vmatpush.msra.mxu0 %v570
        %590 = vmatmul.f32.gmra.mxu0 %v567
        %v591 = vpop.f32.mrf.mxu0
        %v592 = vadd.f32 0.0, %v591
        %593 = vdwg.mxu0
        %594 = vmatpush.msra.mxu0 0.0
        %595 = vmatpush.msra.mxu0 0.0
        %596 = vmatpush.msra.mxu0 0.0
        %597 = vmatpush.msra.mxu0 0.0
        %598 = vmatpush.msra.mxu0 0.0
        %599 = vmatpush.msra.mxu0 0.0
        %600 = vmatpush.msra.mxu0 0.0
        %601 = vmatpush.msra.mxu0 0.0
        %602 = vmatpush.msra.mxu0 0.0
        %603 = vmatpush.msra.mxu0 0.0
        %604 = vmatpush.msra.mxu0 0.0
        %605 = vmatpush.msra.mxu0 0.0
        %606 = vmatpush.msra.mxu0 0.0
        %607 = vmatpush.msra.mxu0 0.0
        %608 = vmatpush.msra.mxu0 0.0
        %609 = vmatpush.msra.mxu0 %v572
        %610 = vmatmul.f32.gmra.mxu0 %v567
        %v611 = vpop.f32.mrf.mxu0
        %v612 = vadd.f32 0.0, %v611
        %613 = vdwg.mxu0
        %615 = vst [vmem:[#allocation1] ss:$2 sm:$0xff] %v559
        %v616 = vld.sshfl [vmem:[#allocation1] sm:$0xff pattern:$0x75316420]
        %v617 = vld.sshfl [vmem:[#allocation1 + $0x8] sm:$0xff pattern:$0x75316420]
        %v619 = vsel %vm565, %v552, 0
        %v621 = vsel %vm569, %v616, 0
        %v623 = vsel %vm569, %v617, 0
        %625 = vmatpush.msra.mxu0 0.0
        %626 = vmatpush.msra.mxu0 0.0
        %627 = vmatpush.msra.mxu0 0.0
        %628 = vmatpush.msra.mxu0 0.0
        %629 = vmatpush.msra.mxu0 0.0
        %630 = vmatpush.msra.mxu0 0.0
        %631 = vmatpush.msra.mxu0 0.0
        %632 = vmatpush.msra.mxu0 0.0
        %633 = vmatpush.msra.mxu0 0.0
        %634 = vmatpush.msra.mxu0 0.0
        %635 = vmatpush.msra.mxu0 0.0
        %636 = vmatpush.msra.mxu0 0.0
        %637 = vmatpush.msra.mxu0 0.0
        %638 = vmatpush.msra.mxu0 0.0
        %639 = vmatpush.msra.mxu0 0.0
        %640 = vmatpush.msra.mxu0 %v621
        %641 = vmatmul.f32.gmra.mxu0 %v619
        %v642 = vpop.f32.mrf.mxu0
        %v643 = vadd.f32 %v592, %v642
        %644 = vdwg.mxu0
        %645 = vmatpush.msra.mxu0 0.0
        %646 = vmatpush.msra.mxu0 0.0
        %647 = vmatpush.msra.mxu0 0.0
        %648 = vmatpush.msra.mxu0 0.0
        %649 = vmatpush.msra.mxu0 0.0
        %650 = vmatpush.msra.mxu0 0.0
        %651 = vmatpush.msra.mxu0 0.0
        %652 = vmatpush.msra.mxu0 0.0
        %653 = vmatpush.msra.mxu0 0.0
        %654 = vmatpush.msra.mxu0 0.0
        %655 = vmatpush.msra.mxu0 0.0
        %656 = vmatpush.msra.mxu0 0.0
        %657 = vmatpush.msra.mxu0 0.0
        %658 = vmatpush.msra.mxu0 0.0
        %659 = vmatpush.msra.mxu0 0.0
        %660 = vmatpush.msra.mxu0 %v623
        %661 = vmatmul.f32.gmra.mxu0 %v619
        %v662 = vpop.f32.mrf.mxu0
        %v663 = vadd.f32 %v612, %v662
        %664 = vdwg.mxu0
        %v665 = vstv %s556
        %v666 = vmul.f32 %v643, %v665
        %v667 = vmul.f32 %v663, %v665
        %669 = vset.pattern.permute.xlu0 0
        %670 = vperm.xlu0 %669, %v554
        %v671 = vpop.permute.xlu0 %670
        %v673 = vadd.f32 %v666, %v671
        %v674 = vadd.f32 %v667, %v671
        %v675 = vstv %s557
        %v676 = vmul.f32 %v673, %v675
        %v677 = vmul.f32 %v674, %v675
        %v678 = vstv %s558
        %v679 = vmul.f32 %v559, %v678
        %681 = vst [vmem:[#allocation1] ss:$2 sm:$0xff] %v679
        %v682 = vld.sshfl [vmem:[#allocation1] sm:$0xff pattern:$0x75316420]
        %v683 = vld.sshfl [vmem:[#allocation1 + $0x8] sm:$0xff pattern:$0x75316420]
        %v686 = vadd.f32 %v676, %v682
        %v687 = vadd.f32 %v677, %v683
        %v690 = vrot.slane %v687, 4
        %v691 = vsel %vm569, %v686, %v690
        %693 = vst [vmem:[%s546] sm:$0xff] %v691
        %v694 = vld [vmem:[%s483] sm:$0xff]
        %v695 = vld [vmem:[%s493] sm:$0xff]
        %697 = vst [vmem:[#allocation1] ss:$2 sm:$0xff] %v695
        %v698 = vld.sshfl [vmem:[#allocation1] sm:$0xff pattern:$0x75316420]
        %v699 = vld.sshfl [vmem:[#allocation1 + $0x8] sm:$0xff pattern:$0x75316420]
        %v700 = vsel %vm569, %v698, 0
        %v702 = vsel %vm569, %v699, 0
        %704 = vmatpush.msra.mxu0 0.0
        %705 = vmatpush.msra.mxu0 0.0
        %706 = vmatpush.msra.mxu0 0.0
        %707 = vmatpush.msra.mxu0 0.0
        %708 = vmatpush.msra.mxu0 0.0
        %709 = vmatpush.msra.mxu0 0.0
        %710 = vmatpush.msra.mxu0 0.0
        %711 = vmatpush.msra.mxu0 0.0
        %712 = vmatpush.msra.mxu0 0.0
        %713 = vmatpush.msra.mxu0 0.0
        %714 = vmatpush.msra.mxu0 0.0
        %715 = vmatpush.msra.mxu0 0.0
        %716 = vmatpush.msra.mxu0 0.0
        %717 = vmatpush.msra.mxu0 0.0
        %718 = vmatpush.msra.mxu0 0.0
        %719 = vmatpush.msra.mxu0 %v700
        %720 = vmatmul.f32.gmra.mxu0 %v567
        %v721 = vpop.f32.mrf.mxu0
        %v722 = vadd.f32 0.0, %v721
        %723 = vdwg.mxu0
        %724 = vmatpush.msra.mxu0 0.0
        %725 = vmatpush.msra.mxu0 0.0
        %726 = vmatpush.msra.mxu0 0.0
        %727 = vmatpush.msra.mxu0 0.0
        %728 = vmatpush.msra.mxu0 0.0
        %729 = vmatpush.msra.mxu0 0.0
        %730 = vmatpush.msra.mxu0 0.0
        %731 = vmatpush.msra.mxu0 0.0
        %732 = vmatpush.msra.mxu0 0.0
        %733 = vmatpush.msra.mxu0 0.0
        %734 = vmatpush.msra.mxu0 0.0
        %735 = vmatpush.msra.mxu0 0.0
        %736 = vmatpush.msra.mxu0 0.0
        %737 = vmatpush.msra.mxu0 0.0
        %738 = vmatpush.msra.mxu0 0.0
        %739 = vmatpush.msra.mxu0 %v702
        %740 = vmatmul.f32.gmra.mxu0 %v567
        %v741 = vpop.f32.mrf.mxu0
        %v742 = vadd.f32 0.0, %v741
        %743 = vdwg.mxu0
        %745 = vst [vmem:[#allocation1] ss:$2 sm:$0xff] %v694
        %v746 = vld.sshfl [vmem:[#allocation1] sm:$0xff pattern:$0x75316420]
        %v747 = vld.sshfl [vmem:[#allocation1 + $0x8] sm:$0xff pattern:$0x75316420]
        %v748 = vsel %vm569, %v746, 0
        %v750 = vsel %vm569, %v747, 0
        %752 = vmatpush.msra.mxu0 0.0
        %753 = vmatpush.msra.mxu0 0.0
        %754 = vmatpush.msra.mxu0 0.0
        %755 = vmatpush.msra.mxu0 0.0
        %756 = vmatpush.msra.mxu0 0.0
        %757 = vmatpush.msra.mxu0 0.0
        %758 = vmatpush.msra.mxu0 0.0
        %759 = vmatpush.msra.mxu0 0.0
        %760 = vmatpush.msra.mxu0 0.0
        %761 = vmatpush.msra.mxu0 0.0
        %762 = vmatpush.msra.mxu0 0.0
        %763 = vmatpush.msra.mxu0 0.0
        %764 = vmatpush.msra.mxu0 0.0
        %765 = vmatpush.msra.mxu0 0.0
        %766 = vmatpush.msra.mxu0 0.0
        %767 = vmatpush.msra.mxu0 %v748
        %768 = vmatmul.f32.gmra.mxu0 %v619
        %v769 = vpop.f32.mrf.mxu0
        %v770 = vadd.f32 %v722, %v769
        %771 = vdwg.mxu0
        %772 = vmatpush.msra.mxu0 0.0
        %773 = vmatpush.msra.mxu0 0.0
        %774 = vmatpush.msra.mxu0 0.0
        %775 = vmatpush.msra.mxu0 0.0
        %776 = vmatpush.msra.mxu0 0.0
        %777 = vmatpush.msra.mxu0 0.0
        %778 = vmatpush.msra.mxu0 0.0
        %779 = vmatpush.msra.mxu0 0.0
        %780 = vmatpush.msra.mxu0 0.0
        %781 = vmatpush.msra.mxu0 0.0
        %782 = vmatpush.msra.mxu0 0.0
        %783 = vmatpush.msra.mxu0 0.0
        %784 = vmatpush.msra.mxu0 0.0
        %785 = vmatpush.msra.mxu0 0.0
        %786 = vmatpush.msra.mxu0 0.0
        %787 = vmatpush.msra.mxu0 %v750
        %788 = vmatmul.f32.gmra.mxu0 %v619
        %v789 = vpop.f32.mrf.mxu0
        %v790 = vadd.f32 %v742, %v789
        %791 = vdwg.mxu0
        %v792 = vmul.f32 %v770, %v665
        %v793 = vmul.f32 %v790, %v665
        %v794 = vadd.f32 %v792, %v671
        %v795 = vadd.f32 %v793, %v671
        %v796 = vmul.f32 %v794, %v675
        %v797 = vmul.f32 %v795, %v675
        %v798 = vmul.f32 %v694, %v678
        %800 = vst [vmem:[#allocation1] ss:$2 sm:$0xff] %v798
        %v801 = vld.sshfl [vmem:[#allocation1] sm:$0xff pattern:$0x75316420]
        %v802 = vld.sshfl [vmem:[#allocation1 + $0x8] sm:$0xff pattern:$0x75316420]
        %v805 = vadd.f32 %v796, %v801
        %v806 = vadd.f32 %v797, %v802
        %v809 = vrot.slane %v806, 4
        %v810 = vsel %vm569, %v805, %v809
        %s812 = scalar_lea.vmem %s546, 16 [#allocation16]
        %813 = vst [vmem:[%s812] sm:$0xff] %v810
        %s814 = sadd.s32 %s555, 1
        %s815 = sld [smem:[#allocation2 + %s814]]
        %s816 = sld [smem:[#allocation7 + %s814]]
        %s817 = sld [smem:[#allocation8 + %s814]]
        %s818 = scalar_lea.vmem %s463, 8 [#allocation10]
        %v819 = vld [vmem:[%s818] sm:$0xff]
        %s820 = scalar_lea.vmem %s473, 8 [#allocation11]
        %v821 = vld [vmem:[%s820] sm:$0xff]
        %823 = vst [vmem:[#allocation1] ss:$2 sm:$0xff] %v821
        %v824 = vld.sshfl [vmem:[#allocation1] sm:$0xff pattern:$0x75316420]
        %v825 = vld.sshfl [vmem:[#allocation1 + $0x8] sm:$0xff pattern:$0x75316420]
        %v826 = vsel %vm569, %v824, 0
        %v828 = vsel %vm569, %v825, 0
        %830 = vmatpush.msra.mxu0 0.0
        %831 = vmatpush.msra.mxu0 0.0
        %832 = vmatpush.msra.mxu0 0.0
        %833 = vmatpush.msra.mxu0 0.0
        %834 = vmatpush.msra.mxu0 0.0
        %835 = vmatpush.msra.mxu0 0.0
        %836 = vmatpush.msra.mxu0 0.0
        %837 = vmatpush.msra.mxu0 0.0
        %838 = vmatpush.msra.mxu0 0.0
        %839 = vmatpush.msra.mxu0 0.0
        %840 = vmatpush.msra.mxu0 0.0
        %841 = vmatpush.msra.mxu0 0.0
        %842 = vmatpush.msra.mxu0 0.0
        %843 = vmatpush.msra.mxu0 0.0
        %844 = vmatpush.msra.mxu0 0.0
        %845 = vmatpush.msra.mxu0 %v826
        %846 = vmatmul.f32.gmra.mxu0 %v567
        %v847 = vpop.f32.mrf.mxu0
        %v848 = vadd.f32 0.0, %v847
        %849 = vdwg.mxu0
        %850 = vmatpush.msra.mxu0 0.0
        %851 = vmatpush.msra.mxu0 0.0
        %852 = vmatpush.msra.mxu0 0.0
        %853 = vmatpush.msra.mxu0 0.0
        %854 = vmatpush.msra.mxu0 0.0
        %855 = vmatpush.msra.mxu0 0.0
        %856 = vmatpush.msra.mxu0 0.0
        %857 = vmatpush.msra.mxu0 0.0
        %858 = vmatpush.msra.mxu0 0.0
        %859 = vmatpush.msra.mxu0 0.0
        %860 = vmatpush.msra.mxu0 0.0
        %861 = vmatpush.msra.mxu0 0.0
        %862 = vmatpush.msra.mxu0 0.0
        %863 = vmatpush.msra.mxu0 0.0
        %864 = vmatpush.msra.mxu0 0.0
        %865 = vmatpush.msra.mxu0 %v828
        %866 = vmatmul.f32.gmra.mxu0 %v567
        %v867 = vpop.f32.mrf.mxu0
        %v868 = vadd.f32 0.0, %v867
        %869 = vdwg.mxu0
        %871 = vst [vmem:[#allocation1] ss:$2 sm:$0xff] %v819
        %v872 = vld.sshfl [vmem:[#allocation1] sm:$0xff pattern:$0x75316420]
        %v873 = vld.sshfl [vmem:[#allocation1 + $0x8] sm:$0xff pattern:$0x75316420]
        %v874 = vsel %vm569, %v872, 0
        %v876 = vsel %vm569, %v873, 0
        %878 = vmatpush.msra.mxu0 0.0
        %879 = vmatpush.msra.mxu0 0.0
        %880 = vmatpush.msra.mxu0 0.0
        %881 = vmatpush.msra.mxu0 0.0
        %882 = vmatpush.msra.mxu0 0.0
        %883 = vmatpush.msra.mxu0 0.0
        %884 = vmatpush.msra.mxu0 0.0
        %885 = vmatpush.msra.mxu0 0.0
        %886 = vmatpush.msra.mxu0 0.0
        %887 = vmatpush.msra.mxu0 0.0
        %888 = vmatpush.msra.mxu0 0.0
        %889 = vmatpush.msra.mxu0 0.0
        %890 = vmatpush.msra.mxu0 0.0
        %891 = vmatpush.msra.mxu0 0.0
        %892 = vmatpush.msra.mxu0 0.0
        %893 = vmatpush.msra.mxu0 %v874
        %894 = vmatmul.f32.gmra.mxu0 %v619
        %v895 = vpop.f32.mrf.mxu0
        %v896 = vadd.f32 %v848, %v895
        %897 = vdwg.mxu0
        %898 = vmatpush.msra.mxu0 0.0
        %899 = vmatpush.msra.mxu0 0.0
        %900 = vmatpush.msra.mxu0 0.0
        %901 = vmatpush.msra.mxu0 0.0
        %902 = vmatpush.msra.mxu0 0.0
        %903 = vmatpush.msra.mxu0 0.0
        %904 = vmatpush.msra.mxu0 0.0
        %905 = vmatpush.msra.mxu0 0.0
        %906 = vmatpush.msra.mxu0 0.0
        %907 = vmatpush.msra.mxu0 0.0
        %908 = vmatpush.msra.mxu0 0.0
        %909 = vmatpush.msra.mxu0 0.0
        %910 = vmatpush.msra.mxu0 0.0
        %911 = vmatpush.msra.mxu0 0.0
        %912 = vmatpush.msra.mxu0 0.0
        %913 = vmatpush.msra.mxu0 %v876
        %914 = vmatmul.f32.gmra.mxu0 %v619
        %v915 = vpop.f32.mrf.mxu0
        %v916 = vadd.f32 %v868, %v915
        %917 = vdwg.mxu0
        %v918 = vstv %s815
        %v919 = vmul.f32 %v896, %v918
        %v920 = vmul.f32 %v916, %v918
        %v921 = vadd.f32 %v919, %v671
        %v922 = vadd.f32 %v920, %v671
        %v923 = vstv %s816
        %v924 = vmul.f32 %v921, %v923
        %v925 = vmul.f32 %v922, %v923
        %v926 = vstv %s817
        %v927 = vmul.f32 %v819, %v926
        %929 = vst [vmem:[#allocation1] ss:$2 sm:$0xff] %v927
        %v930 = vld.sshfl [vmem:[#allocation1] sm:$0xff pattern:$0x75316420]
        %v931 = vld.sshfl [vmem:[#allocation1 + $0x8] sm:$0xff pattern:$0x75316420]
        %v934 = vadd.f32 %v924, %v930
        %v935 = vadd.f32 %v925, %v931
        %v938 = vrot.slane %v935, 4
        %v939 = vsel %vm569, %v934, %v938
        %s941 = scalar_lea.vmem %s546, 8 [#allocation16]
        %942 = vst [vmem:[%s941] sm:$0xff] %v939
        %s943 = scalar_lea.vmem %s483, 8 [#allocation13]
        %v944 = vld [vmem:[%s943] sm:$0xff]
        %s945 = scalar_lea.vmem %s493, 8 [#allocation14]
        %v946 = vld [vmem:[%s945] sm:$0xff]
        %948 = vst [vmem:[#allocation1] ss:$2 sm:$0xff] %v946
        %v949 = vld.sshfl [vmem:[#allocation1] sm:$0xff pattern:$0x75316420]
        %v950 = vld.sshfl [vmem:[#allocation1 + $0x8] sm:$0xff pattern:$0x75316420]
        %v951 = vsel %vm569, %v949, 0
        %v953 = vsel %vm569, %v950, 0
        %955 = vmatpush.msra.mxu0 0.0
        %956 = vmatpush.msra.mxu0 0.0
        %957 = vmatpush.msra.mxu0 0.0
        %958 = vmatpush.msra.mxu0 0.0
        %959 = vmatpush.msra.mxu0 0.0
        %960 = vmatpush.msra.mxu0 0.0
        %961 = vmatpush.msra.mxu0 0.0
        %962 = vmatpush.msra.mxu0 0.0
        %963 = vmatpush.msra.mxu0 0.0
        %964 = vmatpush.msra.mxu0 0.0
        %965 = vmatpush.msra.mxu0 0.0
        %966 = vmatpush.msra.mxu0 0.0
        %967 = vmatpush.msra.mxu0 0.0
        %968 = vmatpush.msra.mxu0 0.0
        %969 = vmatpush.msra.mxu0 0.0
        %970 = vmatpush.msra.mxu0 %v951
        %971 = vmatmul.f32.gmra.mxu0 %v567
        %v972 = vpop.f32.mrf.mxu0
        %v973 = vadd.f32 0.0, %v972
        %974 = vdwg.mxu0
        %975 = vmatpush.msra.mxu0 0.0
        %976 = vmatpush.msra.mxu0 0.0
        %977 = vmatpush.msra.mxu0 0.0
        %978 = vmatpush.msra.mxu0 0.0
        %979 = vmatpush.msra.mxu0 0.0
        %980 = vmatpush.msra.mxu0 0.0
        %981 = vmatpush.msra.mxu0 0.0
        %982 = vmatpush.msra.mxu0 0.0
        %983 = vmatpush.msra.mxu0 0.0
        %984 = vmatpush.msra.mxu0 0.0
        %985 = vmatpush.msra.mxu0 0.0
        %986 = vmatpush.msra.mxu0 0.0
        %987 = vmatpush.msra.mxu0 0.0
        %988 = vmatpush.msra.mxu0 0.0
        %989 = vmatpush.msra.mxu0 0.0
        %990 = vmatpush.msra.mxu0 %v953
        %991 = vmatmul.f32.gmra.mxu0 %v567
        %v992 = vpop.f32.mrf.mxu0
        %v993 = vadd.f32 0.0, %v992
        %994 = vdwg.mxu0
        %996 = vst [vmem:[#allocation1] ss:$2 sm:$0xff] %v944
        %v997 = vld.sshfl [vmem:[#allocation1] sm:$0xff pattern:$0x75316420]
        %v998 = vld.sshfl [vmem:[#allocation1 + $0x8] sm:$0xff pattern:$0x75316420]
        %v999 = vsel %vm569, %v997, 0
        %v1001 = vsel %vm569, %v998, 0
        %1003 = vmatpush.msra.mxu0 0.0
        %1004 = vmatpush.msra.mxu0 0.0
        %1005 = vmatpush.msra.mxu0 0.0
        %1006 = vmatpush.msra.mxu0 0.0
        %1007 = vmatpush.msra.mxu0 0.0
        %1008 = vmatpush.msra.mxu0 0.0
        %1009 = vmatpush.msra.mxu0 0.0
        %1010 = vmatpush.msra.mxu0 0.0
        %1011 = vmatpush.msra.mxu0 0.0
        %1012 = vmatpush.msra.mxu0 0.0
        %1013 = vmatpush.msra.mxu0 0.0
        %1014 = vmatpush.msra.mxu0 0.0
        %1015 = vmatpush.msra.mxu0 0.0
        %1016 = vmatpush.msra.mxu0 0.0
        %1017 = vmatpush.msra.mxu0 0.0
        %1018 = vmatpush.msra.mxu0 %v999
        %1019 = vmatmul.f32.gmra.mxu0 %v619
        %v1020 = vpop.f32.mrf.mxu0
        %v1021 = vadd.f32 %v973, %v1020
        %1022 = vdwg.mxu0
        %1023 = vmatpush.msra.mxu0 0.0
        %1024 = vmatpush.msra.mxu0 0.0
        %1025 = vmatpush.msra.mxu0 0.0
        %1026 = vmatpush.msra.mxu0 0.0
        %1027 = vmatpush.msra.mxu0 0.0
        %1028 = vmatpush.msra.mxu0 0.0
        %1029 = vmatpush.msra.mxu0 0.0
        %1030 = vmatpush.msra.mxu0 0.0
        %1031 = vmatpush.msra.mxu0 0.0
        %1032 = vmatpush.msra.mxu0 0.0
        %1033 = vmatpush.msra.mxu0 0.0
        %1034 = vmatpush.msra.mxu0 0.0
        %1035 = vmatpush.msra.mxu0 0.0
        %1036 = vmatpush.msra.mxu0 0.0
        %1037 = vmatpush.msra.mxu0 0.0
        %1038 = vmatpush.msra.mxu0 %v1001
        %1039 = vmatmul.f32.gmra.mxu0 %v619
        %v1040 = vpop.f32.mrf.mxu0
        %v1041 = vadd.f32 %v993, %v1040
        %1042 = vdwg.mxu0
        %v1043 = vmul.f32 %v1021, %v918
        %v1044 = vmul.f32 %v1041, %v918
        %v1045 = vadd.f32 %v1043, %v671
        %v1046 = vadd.f32 %v1044, %v671
        %v1047 = vmul.f32 %v1045, %v923
        %v1048 = vmul.f32 %v1046, %v923
        %v1049 = vmul.f32 %v944, %v926
        %1051 = vst [vmem:[#allocation1] ss:$2 sm:$0xff] %v1049
        %v1052 = vld.sshfl [vmem:[#allocation1] sm:$0xff pattern:$0x75316420]
        %v1053 = vld.sshfl [vmem:[#allocation1 + $0x8] sm:$0xff pattern:$0x75316420]
        %v1056 = vadd.f32 %v1047, %v1052
        %v1057 = vadd.f32 %v1048, %v1053
        %v1060 = vrot.slane %v1057, 4
        %v1061 = vsel %vm569, %v1056, %v1060
        %s1063 = scalar_lea.vmem %s546, 24 [#allocation16]
        %1064 = vst [vmem:[%s1063] sm:$0xff] %v1061
        %s1065 = sand.u32 %s274, 1
        %s1066 = scalar_lea.sflag [#allocation4], %s1065
        %s1067 = sand.u32 %s274, 1
        %s1068 = smul.addr %s1067, 32
        %s1069 = scalar_lea.vmem [#allocation16], %s1068
        // Predicated region
        $region89: #{tpu_custom_call.1} parent=59 // pred_check
          %p1070 = pneg %p284
        $region90: #{tpu_custom_call.1} parent=59 // pred_check_branch
          %1072 = sbr.rel (%p1070) target = $region92
        $region91: #{tpu_custom_call.1} parent=59 // pred_region
          #allocation18 [shape = 'u32[6]{0}', space=smem, size = 0x18, scoped, tag = 'DMA stride descriptor']
          %s1073 = smul.u32 2, %s36
          %1075 = vsyncadd %s1066, 0
          %s1076 = smul.addr %s1073, 2
          %s1077 = smul.addr %s1076, 4
          %s1078 = scalar_lea.hbm %s10, %s1077
          %s1080 = sshll.u32 1, 14
          %s1081 = sxor.u32 4294967295, %s1080
          %s1084 = sshll.u32 7, 18
          %s1085 = sxor.u32 4294967295, %s1084
          %s1086 = sand.u32 0, %s1085
          %s1088 = sor.u32 %s1086, 0
          %s1089 = sshll.u32 %s1069, 4
          %s1090 = int_to_ptr.vmem [resolvable:$true] %s1089
          %s1091 = sshll.u32 %s1078, 4
          %s1092 = int_to_ptr.hbm [resolvable:$true] %s1091
          %1098 = sst [smem:[#allocation18]] 256
          %s1099 = scalar_lea.smem [#allocation18], 1
          %1100 = sst [smem:[%s1099]] 512
          %s1101 = scalar_lea.smem [#allocation18], 2
          %1102 = sst [smem:[%s1101]] 2
          %s1103 = scalar_lea.smem [#allocation18], 3
          %1104 = sst [smem:[%s1103]] 128
          %s1105 = scalar_lea.smem [#allocation18], 4
          %1106 = sst [smem:[%s1105]] 128
          %s1107 = scalar_lea.smem [#allocation18], 5
          %1108 = sst [smem:[%s1107]] 8
          %1110 = dma.general %s1090, 512, %s1092, %s1066, [#allocation17], [#allocation18], %s1088, 0
        $region92: #{tpu_custom_call.1} parent=59 // pred_fallthru
          _
      $region60: #{tpu_custom_call.1} parent=5 // pred_fallthru
        _
      %p1111 = scmp.le.s32.totalorder 2, %s31
      // Predicated region
      $region93: #{tpu_custom_call.1} parent=5 // pred_check
        %p1112 = pneg %p1111
      $region94: #{tpu_custom_call.1} parent=5 // pred_check_branch
        %1114 = sbr.rel (%p1112) target = $region96
      $region95: #{tpu_custom_call.1} parent=5 // pred_region
        %s1115 = ssub.s32 %s31, 2
        // Predicated region
        $region97: #{tpu_custom_call.1} parent=95 // pred_check
          %p1116 = pneg %p290
        $region98: #{tpu_custom_call.1} parent=95 // pred_check_branch
          %1118 = sbr.rel (%p1116) target = $region100
        $region99: #{tpu_custom_call.1} parent=95 // pred_region
          %s1119 = sand.u32 %s275, 1
          %s1120 = scalar_lea.sflag [#allocation4], %s1119
          %s1121 = sand.u32 %s275, 1
          %s1122 = smul.addr %s1121, 32
          %s1123 = scalar_lea.vmem [#allocation16], %s1122
          %1125 = dma.done %s1120, 512
        $region100: #{tpu_custom_call.1} parent=95 // pred_fallthru
          _
      $region96: #{tpu_custom_call.1} parent=5 // pred_fallthru
        _
    $region6: #{tpu_custom_call.1} parent=1 // loop_footer
      %s35 = sadd.s32 1, %s31
    $region7: #{tpu_custom_call.1} parent=1 // loop_footer_branch
      %30 = sbr.rel target = $region3
    $region8: #{tpu_custom_call.1} parent=1 // loop_exit
      _
    %1126 = vsyncpa [#allocation3], 1
    %s1127 = scalar_lea.sflag [#allocation3], 1
    %1128 = vsyncpa %s1127, 1
    %1129 = vsyncpa [#allocation12], 1
    %s1130 = scalar_lea.sflag [#allocation12], 1
    %1131 = vsyncpa %s1130, 1
    %1132 = vsyncpa [#allocation15], 1
    %s1133 = scalar_lea.sflag [#allocation15], 1
    %1134 = vsyncpa %s1133, 1
    %1135 = vsyncpa [#allocation4], 1
    %s1136 = scalar_lea.sflag [#allocation4], 1
    %1137 = vsyncpa %s1136, 1
    %1138 = vsyncpa [#allocation5], 1
    %s1139 = scalar_lea.sflag [#allocation5], 1
    %1140 = vsyncpa %s1139, 1
    %1141 = vsyncpa [#allocation9], 1
    %1142 = vsyncpa [#allocation6], 1
    %s1143 = scalar_lea.sflag [#allocation6], 1
    %1144 = vsyncpa %s1143, 1

</llo_original>
